<compile_context>
chip_gen: v5e
topology: v5e:2x2
jax: 0.10.0
libtpu: 0.0.40
codegen_flags: <defaults>
</compile_context>

<pallas_src>
import jax
import jax.numpy as jnp
from jax.experimental import pallas as pl
from jax.experimental.pallas import tpu as pltpu


def _round_up(x, m):
    return (x + m - 1) // m * m


def dqn_kernel(x_ref, w1_ref, b1_ref, w2_ref, b2_ref, w3_ref, b3_ref, o_ref):
    # In-kernel f32 -> bf16 cast of the activations (MXU operand dtype).
    x = x_ref[...].astype(jnp.bfloat16)

    # layer1 + ReLU (bf16 MXU operands, f32 accumulation; bias/ReLU in f32)
    h1 = jnp.dot(x, w1_ref[...], preferred_element_type=jnp.float32) + b1_ref[...]
    h1 = jnp.maximum(h1, 0.0).astype(jnp.bfloat16)

    # layer2 + ReLU
    h2 = jnp.dot(h1, w2_ref[...], preferred_element_type=jnp.float32) + b2_ref[...]
    h2 = jnp.maximum(h2, 0.0).astype(jnp.bfloat16)

    # layer3 (logits), numerically stable softmax over the last dim, all in f32.
    logits = jnp.dot(h2, w3_ref[...], preferred_element_type=jnp.float32) + b3_ref[...]
    m = jnp.max(logits, axis=-1, keepdims=True)
    e = jnp.exp(logits - m)
    # Exact divide (not pl.reciprocal(approx=True)) so each row sums to 1.
    o_ref[...] = (e / jnp.sum(e, axis=-1, keepdims=True)).astype(o_ref.dtype)


def dqn_forward(x, w1, b1, w2, b2, w3, b3, *, block_b=2048, vmem_limit_bytes=None):
    """Fused DQN forward. x: (B, n_obs) f32 -> (B, n_actions) f32 probabilities.

    Weights w1/w2/w3 are expected in bf16 (stored once at init), biases in f32.
    For very large B, sweep block_b up to ~8k and raise vmem_limit_bytes
    (v5e/v6e: up to ~96-100 MiB of 128 MiB; v7x: stay under the 64 MiB physical).
    """
    B, n_obs = x.shape
    n_actions = w3.shape[1]

    # Batch tile: sublane-aligned, at least 2 grid steps when B > 8 (v7x
    # megacore), capped at block_b to amortize the ~0.35us per-step overhead.
    tb = max(8, min(block_b, _round_up(pl.cdiv(B, 2), 8)))
    grid = (pl.cdiv(B, tb),)

    # Weights/biases: index_map returns (0, 0) every step -> VMEM-resident
    # across the whole grid (never re-DMA'd).
    resident = lambda shape: pl.BlockSpec(shape, lambda i: (0, 0))

    return pl.pallas_call(
        dqn_kernel,
        out_shape=jax.ShapeDtypeStruct((B, n_actions), jnp.float32),
        grid=grid,
        in_specs=[
            pl.BlockSpec((tb, n_obs), lambda i: (i, 0)),   # x: tiled over batch
            resident(w1.shape), resident(b1.shape),
            resident(w2.shape), resident(b2.shape),
            resident(w3.shape), resident(b3.shape),
        ],
        out_specs=pl.BlockSpec((tb, n_actions), lambda i: (i, 0)),
        compiler_params=pltpu.CompilerParams(
            dimension_semantics=("parallel",),   # megacore batch sharding (v7x)
            vmem_limit_bytes=vmem_limit_bytes,   # raise together with block_b
        ),
    )(x, w1, b1, w2, b2, w3, b3)


def init_params(key, n_observations, n_actions, hidden=128):
    """PyTorch-Linear-style init (uniform +/- 1/sqrt(fan_in)).

    Weights are returned already cast to bf16 (done once here, not per call);
    biases stay f32 as (1, out).
    """
    ks = jax.random.split(key, 6)

    def lin(kw, kb, fan_in, fan_out):
        bound = 1.0 / jnp.sqrt(fan_in)
        w = jax.random.uniform(kw, (fan_in, fan_out), jnp.float32, -bound, bound)
        b = jax.random.uniform(kb, (1, fan_out), jnp.float32, -bound, bound)
        return w.astype(jnp.bfloat16), b

    w1, b1 = lin(ks[0], ks[1], n_observations, hidden)
    w2, b2 = lin(ks[2], ks[3], hidden, hidden)
    w3, b3 = lin(ks[4], ks[5], hidden, n_actions)
    return w1, b1, w2, b2, w3, b3


def reference_forward(x, w1, b1, w2, b2, w3, b3):
    # Pure-JAX reference in f32 (same bf16-quantized weights as the kernel).
    w1, w2, w3 = (w.astype(jnp.float32) for w in (w1, w2, w3))
    h1 = jnp.maximum(x @ w1 + b1, 0.0)
    h2 = jnp.maximum(h1 @ w2 + b2, 0.0)
    logits = h2 @ w3 + b3
    return jax.nn.softmax(logits, axis=-1)


if __name__ == "__main__":
    n_observations = 16
    n_actions = 8

    key = jax.random.PRNGKey(0)
    k_x1, k_x2, k_p = jax.random.split(key, 3)
    params = init_params(k_p, n_observations, n_actions)

    # Case 1: tiny action-selection batch (single partial block).
    # Case 2: multi-step batch exercising the grid, resident weights and the
    #         masked partial last block (300 = 152 + 148).
    for batch, k_x in ((2, k_x1), (300, k_x2)):
        x = jax.random.normal(k_x, (batch, n_observations), jnp.float32)
        out = jax.block_until_ready(dqn_forward(x, *params))
        ref = reference_forward(x, *params)
        assert out.shape == (batch, n_actions)
        # bf16 x / bf16 intermediates -> looser-than-f32 tolerance on values.
        assert jnp.allclose(out, ref, atol=3e-2, rtol=3e-2)
        # Exact softmax normalization: rows sum to 1 to f32 precision.
        assert jnp.allclose(jnp.sum(out, axis=-1), 1.0, atol=1e-3)

    print("KERNEL_OK")
</pallas_src>

<mosaic_0001>
module attributes {stable_mosaic.version = 11 : i64} {
  func.func @dqn_kernel(%arg0: i32, %arg1: memref<8x16xf32, #tpu.memory_space<vmem>>, %arg2: memref<16x128xbf16, #tpu.memory_space<vmem>>, %arg3: memref<1x128xf32, #tpu.memory_space<vmem>>, %arg4: memref<128x128xbf16, #tpu.memory_space<vmem>>, %arg5: memref<1x128xf32, #tpu.memory_space<vmem>>, %arg6: memref<128x8xbf16, #tpu.memory_space<vmem>>, %arg7: memref<1x8xf32, #tpu.memory_space<vmem>>, %arg8: memref<8x8xf32, #tpu.memory_space<vmem>>) attributes {dimension_semantics = [#tpu.dimension_semantics<parallel>], iteration_bounds = array<i64: 1>, scalar_prefetch = 0 : i64, scratch_operands = 0 : i64, tpu.core_type = #tpu.core_type<tc>, window_params = [{transform_indices = @transform_0, window_bounds = array<i64: 8, 16>}, {pipeline_mode = #tpu.pipeline_mode<synchronous>, transform_indices = @transform_1, window_bounds = array<i64: 16, 128>}, {pipeline_mode = #tpu.pipeline_mode<synchronous>, transform_indices = @transform_2, window_bounds = array<i64: 1, 128>}, {pipeline_mode = #tpu.pipeline_mode<synchronous>, transform_indices = @transform_3, window_bounds = array<i64: 128, 128>}, {pipeline_mode = #tpu.pipeline_mode<synchronous>, transform_indices = @transform_4, window_bounds = array<i64: 1, 128>}, {pipeline_mode = #tpu.pipeline_mode<synchronous>, transform_indices = @transform_5, window_bounds = array<i64: 128, 8>}, {pipeline_mode = #tpu.pipeline_mode<synchronous>, transform_indices = @transform_6, window_bounds = array<i64: 1, 8>}, {transform_indices = @transform_7, window_bounds = array<i64: 8, 8>}]} {
    %c0 = arith.constant 0 : index
    %c0_0 = arith.constant 0 : index
    %0 = vector.load %arg1[%c0, %c0_0] : memref<8x16xf32, #tpu.memory_space<vmem>>, vector<8x16xf32>
    %1 = arith.truncf %0 : vector<8x16xf32> to vector<8x16xbf16>
    %c0_1 = arith.constant 0 : index
    %c0_2 = arith.constant 0 : index
    %2 = vector.load %arg2[%c0_1, %c0_2] : memref<16x128xbf16, #tpu.memory_space<vmem>>, vector<16x128xbf16>
    %cst = arith.constant dense<0.000000e+00> : vector<8x128xf32>
    %3 = tpu.matmul %1, %2, %cst {dimension_numbers = #tpu.dot_dimension_numbers<[1], [0], [0], [1], [0, 0, 1, 1], [], []>} : vector<8x16xbf16>, vector<16x128xbf16>, vector<8x128xf32> -> vector<8x128xf32>
    %c0_3 = arith.constant 0 : index
    %c0_4 = arith.constant 0 : index
    %4 = vector.load %arg3[%c0_3, %c0_4] : memref<1x128xf32, #tpu.memory_space<vmem>>, vector<1x128xf32>
    %5 = vector.broadcast %4 : vector<1x128xf32> to vector<8x128xf32>
    %6 = arith.addf %3, %5 : vector<8x128xf32>
    %cst_5 = arith.constant 0.000000e+00 : f32
    %7 = vector.broadcast %cst_5 : f32 to vector<8x128xf32>
    %8 = arith.maximumf %6, %7 : vector<8x128xf32>
    %9 = arith.truncf %8 : vector<8x128xf32> to vector<8x128xbf16>
    %c0_6 = arith.constant 0 : index
    %c0_7 = arith.constant 0 : index
    %10 = vector.load %arg4[%c0_6, %c0_7] : memref<128x128xbf16, #tpu.memory_space<vmem>>, vector<128x128xbf16>
    %cst_8 = arith.constant dense<0.000000e+00> : vector<8x128xf32>
    %11 = tpu.matmul %9, %10, %cst_8 {dimension_numbers = #tpu.dot_dimension_numbers<[1], [0], [0], [1], [0, 0, 1, 1], [], []>} : vector<8x128xbf16>, vector<128x128xbf16>, vector<8x128xf32> -> vector<8x128xf32>
    %c0_9 = arith.constant 0 : index
    %c0_10 = arith.constant 0 : index
    %12 = vector.load %arg5[%c0_9, %c0_10] : memref<1x128xf32, #tpu.memory_space<vmem>>, vector<1x128xf32>
    %13 = vector.broadcast %12 : vector<1x128xf32> to vector<8x128xf32>
    %14 = arith.addf %11, %13 : vector<8x128xf32>
    %cst_11 = arith.constant 0.000000e+00 : f32
    %15 = vector.broadcast %cst_11 : f32 to vector<8x128xf32>
    %16 = arith.maximumf %14, %15 : vector<8x128xf32>
    %17 = arith.truncf %16 : vector<8x128xf32> to vector<8x128xbf16>
    %c0_12 = arith.constant 0 : index
    %c0_13 = arith.constant 0 : index
    %18 = vector.load %arg6[%c0_12, %c0_13] : memref<128x8xbf16, #tpu.memory_space<vmem>>, vector<128x8xbf16>
    %cst_14 = arith.constant dense<0.000000e+00> : vector<8x8xf32>
    %19 = tpu.matmul %17, %18, %cst_14 {dimension_numbers = #tpu.dot_dimension_numbers<[1], [0], [0], [1], [0, 0, 1, 1], [], []>} : vector<8x128xbf16>, vector<128x8xbf16>, vector<8x8xf32> -> vector<8x8xf32>
    %c0_15 = arith.constant 0 : index
    %c0_16 = arith.constant 0 : index
    %20 = vector.load %arg7[%c0_15, %c0_16] : memref<1x8xf32, #tpu.memory_space<vmem>>, vector<1x8xf32>
    %21 = vector.broadcast %20 : vector<1x8xf32> to vector<8x8xf32>
    %22 = arith.addf %19, %21 : vector<8x8xf32>
    %cst_17 = arith.constant dense<0xFF800000> : vector<8xf32>
    %23 = vector.multi_reduction <maximumf>, %22, %cst_17 [1] : vector<8x8xf32> to vector<8xf32>
    %24 = vector.shape_cast %23 : vector<8xf32> to vector<8x1xf32>
    %25 = vector.broadcast %24 : vector<8x1xf32> to vector<8x8xf32>
    %26 = arith.subf %22, %25 : vector<8x8xf32>
    %27 = math.exp %26 : vector<8x8xf32>
    %cst_18 = arith.constant dense<0.000000e+00> : vector<8xf32>
    %28 = vector.multi_reduction <add>, %27, %cst_18 [1] : vector<8x8xf32> to vector<8xf32>
    %29 = vector.shape_cast %28 : vector<8xf32> to vector<8x1xf32>
    %30 = vector.broadcast %29 : vector<8x1xf32> to vector<8x8xf32>
    %31 = arith.divf %27, %30 : vector<8x8xf32>
    %c0_19 = arith.constant 0 : index
    %c0_20 = arith.constant 0 : index
    %32 = vector.load %arg8[%c0_19, %c0_20] : memref<8x8xf32, #tpu.memory_space<vmem>>, vector<8x8xf32>
    tpu.vector_store %arg8[%c0_19, %c0_20], %31 {strides = array<i32>} : memref<8x8xf32, #tpu.memory_space<vmem>>, vector<8x8xf32>,
    return
  }
  func.func @transform_0(%arg0: i32) -> (i32, i32) {
    %c0_i32 = arith.constant 0 : i32
    %c0_i32_0 = arith.constant 0 : i32
    return %arg0, %c0_i32 : i32, i32
  }
  func.func @transform_1(%arg0: i32) -> (i32, i32) {
    %c0_i32 = arith.constant 0 : i32
    %c0_i32_0 = arith.constant 0 : i32
    %c0_i32_1 = arith.constant 0 : i32
    return %c0_i32, %c0_i32_0 : i32, i32
  }
  func.func @transform_2(%arg0: i32) -> (i32, i32) {
    %c0_i32 = arith.constant 0 : i32
    %c0_i32_0 = arith.constant 0 : i32
    %c0_i32_1 = arith.constant 0 : i32
    return %c0_i32, %c0_i32_0 : i32, i32
  }
  func.func @transform_3(%arg0: i32) -> (i32, i32) {
    %c0_i32 = arith.constant 0 : i32
    %c0_i32_0 = arith.constant 0 : i32
    %c0_i32_1 = arith.constant 0 : i32
    return %c0_i32, %c0_i32_0 : i32, i32
  }
  func.func @transform_4(%arg0: i32) -> (i32, i32) {
    %c0_i32 = arith.constant 0 : i32
    %c0_i32_0 = arith.constant 0 : i32
    %c0_i32_1 = arith.constant 0 : i32
    return %c0_i32, %c0_i32_0 : i32, i32
  }
  func.func @transform_5(%arg0: i32) -> (i32, i32) {
    %c0_i32 = arith.constant 0 : i32
    %c0_i32_0 = arith.constant 0 : i32
    %c0_i32_1 = arith.constant 0 : i32
    return %c0_i32, %c0_i32_0 : i32, i32
  }
  func.func @transform_6(%arg0: i32) -> (i32, i32) {
    %c0_i32 = arith.constant 0 : i32
    %c0_i32_0 = arith.constant 0 : i32
    %c0_i32_1 = arith.constant 0 : i32
    return %c0_i32, %c0_i32_0 : i32, i32
  }
  func.func @transform_7(%arg0: i32) -> (i32, i32) {
    %c0_i32 = arith.constant 0 : i32
    %c0_i32_0 = arith.constant 0 : i32
    return %arg0, %c0_i32 : i32, i32
  }
}

</mosaic_0001>

<llo_original>
// kernel: tpu_custom_call.1
$region0: #{tpu_custom_call.1}
  #allocation0 [shape = 'u32[]', space=smem, size = 0x4, offset = 0x4, fixed_abs, tag = 'smem constant byte address 0x4 - core index']
  #allocation1 [shape = 'u32[72,128]{1,0:T(1,128)}', space=vmem, size = 0x9000, scoped, tag = 'internal scratch']
  %s0 = inlined_call_operand.vmem [shape: f32[2,16], index: 0, kind: input, shape index: {}]
  %s1 = inlined_call_operand.hbm [shape: bf16[16,128], index: 1, kind: input, shape index: {}]
  %s2 = inlined_call_operand.vmem [shape: f32[1,128], index: 2, kind: input, shape index: {}]
  %s3 = inlined_call_operand.vmem [shape: bf16[128,128], index: 3, kind: input, shape index: {}]
  %s4 = inlined_call_operand.vmem [shape: f32[1,128], index: 4, kind: input, shape index: {}]
  %s5 = inlined_call_operand.vmem [shape: bf16[128,8], index: 5, kind: input, shape index: {}]
  %s6 = inlined_call_operand.vmem [shape: f32[1,8], index: 6, kind: input, shape index: {}]
  %s7 = inlined_call_operand.hbm [shape: f32[2,8], index: 7, kind: output, shape index: {}]
  %s8 = sld [smem:[#allocation0]]
  $region42: #{tpu_custom_call.1} parent=0
    _
  %s10 = ssub.s32 1, %s8
  %s11 = scalar_select 0, %s10, %s8
  $region1: #{tpu_custom_call.1} parent=0
    #allocation2 [shape = 'u8[4096]{0}', space=vmem, size = 0x1000, scoped, tag = 'input window, operand 1, single buffered']
    #allocation3 [shape = 's32[1]{0}', space=sflag, size = 0x4, scoped, tag = 'scoped memory for tpu_custom_call.1']
    #allocation4 [shape = 's32[1]{0}', space=sflag, size = 0x4, scoped, tag = 'scoped memory for tpu_custom_call.1']
    #allocation5 [shape = 'u8[4096]{0}', space=vmem, size = 0x1000, scoped, tag = 'output window, operand 0, single buffered']
    %12 = vsyncpa [#allocation3], 0
    %13 = vsyncpa [#allocation4], 0
    // Predicated region
    $region2: #{tpu_custom_call.1} parent=1 // pred_check
      _
    $region3: #{tpu_custom_call.1} parent=1 // pred_check_branch
      %15 = sbr.rel (0) target = $region5
    $region4: #{tpu_custom_call.1} parent=1 // pred_region
      _
    $region5: #{tpu_custom_call.1} parent=1 // pred_fallthru
      _
    // Predicated region
    $region6: #{tpu_custom_call.1} parent=1 // pred_check
      _
    $region7: #{tpu_custom_call.1} parent=1 // pred_check_branch
      %17 = sbr.rel (0) target = $region9
    $region8: #{tpu_custom_call.1} parent=1 // pred_region
      %19 = vsyncadd [#allocation3], 0
      %s20 = sshll.u32 %s1, 4
      %s21 = int_to_ptr.hbm [resolvable:$true] %s20
      %s22 = sshll.u32 [#allocation2], 4
      %s23 = int_to_ptr.vmem [resolvable:$true] %s22
      %28 = dma.hbm_to_vmem [thread:$0]  %s21, 128, %s23, [#allocation3], 64, 64, 4
    $region9: #{tpu_custom_call.1} parent=1 // pred_fallthru
      _
    // Predicated region
    $region10: #{tpu_custom_call.1} parent=1 // pred_check
      _
    $region11: #{tpu_custom_call.1} parent=1 // pred_check_branch
      %30 = sbr.rel (0) target = $region13
    $region12: #{tpu_custom_call.1} parent=1 // pred_region
      _
    $region13: #{tpu_custom_call.1} parent=1 // pred_fallthru
      _
    // Predicated region
    $region14: #{tpu_custom_call.1} parent=1 // pred_check
      _
    $region15: #{tpu_custom_call.1} parent=1 // pred_check_branch
      %32 = sbr.rel (0) target = $region17
    $region16: #{tpu_custom_call.1} parent=1 // pred_region
      _
    $region17: #{tpu_custom_call.1} parent=1 // pred_fallthru
      _
    // Predicated region
    $region18: #{tpu_custom_call.1} parent=1 // pred_check
      _
    $region19: #{tpu_custom_call.1} parent=1 // pred_check_branch
      %34 = sbr.rel (0) target = $region21
    $region20: #{tpu_custom_call.1} parent=1 // pred_region
      _
    $region21: #{tpu_custom_call.1} parent=1 // pred_fallthru
      _
    // Predicated region
    $region22: #{tpu_custom_call.1} parent=1 // pred_check
      _
    $region23: #{tpu_custom_call.1} parent=1 // pred_check_branch
      %36 = sbr.rel (0) target = $region25
    $region24: #{tpu_custom_call.1} parent=1 // pred_region
      _
    $region25: #{tpu_custom_call.1} parent=1 // pred_fallthru
      _
    // Predicated region
    $region26: #{tpu_custom_call.1} parent=1 // pred_check
      _
    $region27: #{tpu_custom_call.1} parent=1 // pred_check_branch
      %38 = sbr.rel (0) target = $region29
    $region28: #{tpu_custom_call.1} parent=1 // pred_region
      _
    $region29: #{tpu_custom_call.1} parent=1 // pred_fallthru
      _
    // Predicated region
    $region30: #{tpu_custom_call.1} parent=1 // pred_check
      _
    $region31: #{tpu_custom_call.1} parent=1 // pred_check_branch
      %40 = sbr.rel (0) target = $region33
    $region32: #{tpu_custom_call.1} parent=1 // pred_region
      %42 = dma.done [#allocation3], 128
    $region33: #{tpu_custom_call.1} parent=1 // pred_fallthru
      _
    %v44 = vld [vmem:[%s0] sm:$0xff]
    %v45 = vpack.c.bf16 %v44, %v44
    %v46 = vld [vmem:[#allocation2] sm:$0xf]
    %v47 = vld [vmem:[#allocation2 + $0x4] sm:$0xf]
    %v48 = vld [vmem:[%s2] sm:$0x1]
    %v50 = vperm.slane %v48, 0
    %v54 = vunpack.c.l.b16 %v46
    %v55 = vunpack.c.l.b16 %v47
    %v56 = vpack.c.b16 %v55, %v54
    %vm58 = vcmask 130048
    %v60 = vsel %vm58, %v45, 0
    %62 = vmatpush.bf16.msra.mxu0 0
    %63 = vmatpush.bf16.msra.mxu0 0
    %64 = vmatpush.bf16.msra.mxu0 0
    %65 = vmatpush.bf16.msra.mxu0 0
    %66 = vmatpush.bf16.msra.mxu0 0
    %67 = vmatpush.bf16.msra.mxu0 0
    %68 = vmatpush.bf16.msra.mxu0 0
    %69 = vmatpush.bf16.msra.mxu0 %v56
    %70 = vmatmul.bf16.gmra.mxu0 %v60
    %v71 = vpop.f32.mrf.mxu0
    %v72 = vadd.f32 %v50, %v71
    %v73 = vpop.f32.mrf.mxu0
    %74 = vdwg.mxu0
    %v75 = vmax.f32 %v72, 0.0
    %v76 = vpack.c.bf16 %v75, %v75
    %v77 = vld [vmem:[%s3] sm:$0xf]
    %v78 = vld [vmem:[%s3 + $0x4] sm:$0xf]
    %v79 = vld [vmem:[%s3 + $0x8] sm:$0xf]
    %v80 = vld [vmem:[%s3 + $0xc] sm:$0xf]
    %v81 = vld [vmem:[%s3 + $0x10] sm:$0xf]
    %v82 = vld [vmem:[%s3 + $0x14] sm:$0xf]
    %v83 = vld [vmem:[%s3 + $0x18] sm:$0xf]
    %v84 = vld [vmem:[%s3 + $0x1c] sm:$0xf]
    %v85 = vld [vmem:[%s3 + $0x20] sm:$0xf]
    %v86 = vld [vmem:[%s3 + $0x24] sm:$0xf]
    %v87 = vld [vmem:[%s3 + $0x28] sm:$0xf]
    %v88 = vld [vmem:[%s3 + $0x2c] sm:$0xf]
    %v89 = vld [vmem:[%s3 + $0x30] sm:$0xf]
    %v90 = vld [vmem:[%s3 + $0x34] sm:$0xf]
    %v91 = vld [vmem:[%s3 + $0x38] sm:$0xf]
    %v92 = vld [vmem:[%s3 + $0x3c] sm:$0xf]
    %v93 = vld [vmem:[%s4] sm:$0x1]
    %v95 = vperm.slane %v93, 0
    %v113 = vunpack.c.l.b16 %v77
    %v114 = vunpack.c.l.b16 %v78
    %v115 = vunpack.c.l.b16 %v79
    %v116 = vunpack.c.l.b16 %v80
    %v117 = vunpack.c.l.b16 %v81
    %v118 = vunpack.c.l.b16 %v82
    %v119 = vunpack.c.l.b16 %v83
    %v120 = vunpack.c.l.b16 %v84
    %v121 = vunpack.c.l.b16 %v85
    %v122 = vunpack.c.l.b16 %v86
    %v123 = vunpack.c.l.b16 %v87
    %v124 = vunpack.c.l.b16 %v88
    %v125 = vunpack.c.l.b16 %v89
    %v126 = vunpack.c.l.b16 %v90
    %v127 = vunpack.c.l.b16 %v91
    %v128 = vunpack.c.l.b16 %v92
    %v129 = vpack.c.b16 %v114, %v113
    %v130 = vpack.c.b16 %v116, %v115
    %v131 = vpack.c.b16 %v118, %v117
    %v132 = vpack.c.b16 %v120, %v119
    %v133 = vpack.c.b16 %v122, %v121
    %v134 = vpack.c.b16 %v124, %v123
    %v135 = vpack.c.b16 %v126, %v125
    %v136 = vpack.c.b16 %v128, %v127
    %145 = vmatpush.bf16.msra.mxu0 %v136
    %146 = vmatpush.bf16.msra.mxu0 %v135
    %147 = vmatpush.bf16.msra.mxu0 %v134
    %148 = vmatpush.bf16.msra.mxu0 %v133
    %149 = vmatpush.bf16.msra.mxu0 %v132
    %150 = vmatpush.bf16.msra.mxu0 %v131
    %151 = vmatpush.bf16.msra.mxu0 %v130
    %152 = vmatpush.bf16.msra.mxu0 %v129
    %153 = vmatmul.bf16.gmra.mxu0 %v76
    %v154 = vpop.f32.mrf.mxu0
    %v155 = vadd.f32 %v95, %v154
    %v156 = vpop.f32.mrf.mxu0
    %157 = vdwg.mxu0
    %v158 = vmax.f32 %v155, 0.0
    %v159 = vpack.c.bf16 %v158, %v158
    %v160 = vld [vmem:[%s5] sm:$0xf]
    %v161 = vld [vmem:[%s5 + $0x4] sm:$0xf]
    %v162 = vld [vmem:[%s5 + $0x8] sm:$0xf]
    %v163 = vld [vmem:[%s5 + $0xc] sm:$0xf]
    %v164 = vld [vmem:[%s5 + $0x10] sm:$0xf]
    %v165 = vld [vmem:[%s5 + $0x14] sm:$0xf]
    %v166 = vld [vmem:[%s5 + $0x18] sm:$0xf]
    %v167 = vld [vmem:[%s5 + $0x1c] sm:$0xf]
    %v168 = vld [vmem:[%s5 + $0x20] sm:$0xf]
    %v169 = vld [vmem:[%s5 + $0x24] sm:$0xf]
    %v170 = vld [vmem:[%s5 + $0x28] sm:$0xf]
    %v171 = vld [vmem:[%s5 + $0x2c] sm:$0xf]
    %v172 = vld [vmem:[%s5 + $0x30] sm:$0xf]
    %v173 = vld [vmem:[%s5 + $0x34] sm:$0xf]
    %v174 = vld [vmem:[%s5 + $0x38] sm:$0xf]
    %v175 = vld [vmem:[%s5 + $0x3c] sm:$0xf]
    %v176 = vld [vmem:[%s6] sm:$0x1]
    %v178 = vperm.slane %v176, 0
    %v196 = vunpack.c.l.b16 %v160
    %v197 = vunpack.c.l.b16 %v161
    %v198 = vunpack.c.l.b16 %v162
    %v199 = vunpack.c.l.b16 %v163
    %v200 = vunpack.c.l.b16 %v164
    %v201 = vunpack.c.l.b16 %v165
    %v202 = vunpack.c.l.b16 %v166
    %v203 = vunpack.c.l.b16 %v167
    %v204 = vunpack.c.l.b16 %v168
    %v205 = vunpack.c.l.b16 %v169
    %v206 = vunpack.c.l.b16 %v170
    %v207 = vunpack.c.l.b16 %v171
    %v208 = vunpack.c.l.b16 %v172
    %v209 = vunpack.c.l.b16 %v173
    %v210 = vunpack.c.l.b16 %v174
    %v211 = vunpack.c.l.b16 %v175
    %v212 = vpack.c.b16 %v197, %v196
    %v213 = vpack.c.b16 %v199, %v198
    %v214 = vpack.c.b16 %v201, %v200
    %v215 = vpack.c.b16 %v203, %v202
    %v216 = vpack.c.b16 %v205, %v204
    %v217 = vpack.c.b16 %v207, %v206
    %v218 = vpack.c.b16 %v209, %v208
    %v219 = vpack.c.b16 %v211, %v210
    %228 = vmatpush.bf16.msra.mxu0 %v219
    %229 = vmatpush.bf16.msra.mxu0 %v218
    %230 = vmatpush.bf16.msra.mxu0 %v217
    %231 = vmatpush.bf16.msra.mxu0 %v216
    %232 = vmatpush.bf16.msra.mxu0 %v215
    %233 = vmatpush.bf16.msra.mxu0 %v214
    %234 = vmatpush.bf16.msra.mxu0 %v213
    %235 = vmatpush.bf16.msra.mxu0 %v212
    %236 = vmatmul.bf16.gmra.mxu0 %v159
    %v237 = vpop.f32.mrf.mxu0
    %v238 = vadd.f32 %v178, %v237
    %v239 = vpop.f32.mrf.mxu0
    %240 = vdwg.mxu0
    %vm241 = vcmask 64512
    %v242 = vsel %vm241, %v238, -inf
    %243 = vmax.xlane.f32.xlu0 %v242
    %v244 = vpop.xlane.xlu0 %243
    %v245 = vsub.f32 %v238, %v244
    %v246 = vmul.f32 %v245, 1.442695
    %v247 = vpow.pop %v246
    %v248 = vsel %vm241, %v247, 0.0
    %249 = vadd.xlane.f32.xlu0 %v248
    %v250 = vpop.xlane.xlu0 %249
    %v251 = vrcp.pop %v250
    %v252 = vmul.f32 %v250, %v251
    %v253 = vsub.f32 1.0, %v252
    %v254 = vmul.f32 %v251, %v253
    %v255 = vadd.f32 %v251, %v254
    %vm256 = vweird.f32 %v250
    %vm257 = vweird.f32 %v251
    %vm258 = vmor %vm256, %vm257
    %v259 = vsel %vm258, %v251, %v255
    %v260 = vand.u32 2147483647, %v250
    %vm261 = vcmp.eq.f32.partialorder %v260, 8.507059e+37
    %v262 = vand.u32 %v250, 2147483648
    %v263 = vor.u32 1.1754944e-38, %v262
    %v264 = vsel %vm261, %v263, %v259
    %v265 = vmul.f32 %v247, %v264
    %266 = vst.msk [vmem:[#allocation5] sm:$0xff] %vm241, %v265
    // Predicated region
    $region34: #{tpu_custom_call.1} parent=1 // pred_check
      _
    $region35: #{tpu_custom_call.1} parent=1 // pred_check_branch
      %268 = sbr.rel (0) target = $region37
    $region36: #{tpu_custom_call.1} parent=1 // pred_region
      %270 = vsyncadd [#allocation4], 96
      %s271 = sshll.u32 [#allocation5], 4
      %s272 = int_to_ptr.vmem [resolvable:$true] %s271
      %s273 = sshll.u32 %s7, 4
      %s274 = int_to_ptr.hbm [resolvable:$true] %s273
      %279 = dma.vmem_to_hbm [thread:$0]  %s272, 32, %s274, [#allocation4], 32, 32, 2
    $region37: #{tpu_custom_call.1} parent=1 // pred_fallthru
      _
    // Predicated region
    $region38: #{tpu_custom_call.1} parent=1 // pred_check
      _
    $region39: #{tpu_custom_call.1} parent=1 // pred_check_branch
      %281 = sbr.rel (0) target = $region41
    $region40: #{tpu_custom_call.1} parent=1 // pred_region
      %283 = dma.done [#allocation4], 128
    $region41: #{tpu_custom_call.1} parent=1 // pred_fallthru
      _
    %284 = vsyncpa [#allocation3], 1
    %285 = vsyncpa [#allocation4], 1

</llo_original>
